<compile_context>
chip_gen: v5e
topology: v5e:2x2
jax: 0.10.0
libtpu: 0.0.40
codegen_flags: <defaults>
</compile_context>

<pallas_src>
import functools

import jax
import jax.numpy as jnp
from jax.experimental import pallas as pl
from jax.experimental.pallas import tpu as pltpu


def _round_up(x, m):
    return (x + m - 1) // m * m


def _cdiv(a, b):
    return -(-a // b)


# ----------------------------- Pallas kernels ----------------------------- #

def _mm_bias_relu_kernel(x_ref, w_ref, b_ref, o_ref):
    """Single K-step: o = relu(x @ w + b); f32 MXU accumulation, no scratch."""
    acc = jnp.dot(x_ref[...], w_ref[...], preferred_element_type=jnp.float32)
    o_ref[...] = jnp.maximum(acc + b_ref[...], 0.0).astype(o_ref.dtype)


def _mm_bias_relu_acc_kernel(x_ref, w_ref, b_ref, o_ref, acc_ref):
    """K-tiled: acc initialized with the broadcast bias, epilogue is just relu."""
    @pl.when(pl.program_id(2) == 0)
    def _():
        acc_ref[...] = jnp.broadcast_to(b_ref[...], acc_ref.shape)

    acc_ref[...] += jnp.dot(x_ref[...], w_ref[...],
                            preferred_element_type=jnp.float32)

    @pl.when(pl.program_id(2) == pl.num_programs(2) - 1)
    def _():
        o_ref[...] = jnp.maximum(acc_ref[...], 0.0).astype(o_ref.dtype)


def matmul_bias_relu(x, w, b, *, n_out=None, out_dtype=jnp.float32,
                     tm_max=512, tn_max=256):
    """relu(x @ w + b) on the MXU with a tiled, software-pipelined grid.

    x:(M,K) bf16/f32, w:(K,N) bf16/f32, b:(N,) f32 -> (M, n_out) out_dtype.
    The output N is padded to a multiple of 128 internally (lane-dense stores);
    only the first `n_out` columns are returned.
    """
    M, K = x.shape
    Kw, N = w.shape
    assert K == Kw and b.shape == (N,)
    if n_out is None:
        n_out = N

    # ---- N: lane-dense output (multiple of 128) ----
    Np = _round_up(N, 128)
    if Np != N:
        w = jnp.pad(w, ((0, 0), (0, Np - N)))
        b = jnp.pad(b, (0, Np - N))
    TN = tn_max if Np % tn_max == 0 else 128

    # ---- K: keep a multiple of 16 (bf16 sublane packing); tile with an
    #      accumulator only when K is large. ----
    if K > 2048:
        TK = 512
        Kp = _round_up(K, TK)
    else:
        Kp = _round_up(K, 16)
        TK = Kp
    if Kp != K:
        x = jnp.pad(x, ((0, 0), (0, Kp - K)))
        w = jnp.pad(w, ((0, Kp - K), (0, 0)))

    # ---- M: pad to a multiple of 16 and give the grid >=2 M blocks whenever
    #      possible so both v7x TensorCores get work. ----
    Mp16 = _round_up(M, 16)
    n_m = 1 if Mp16 < 32 else max(2, _cdiv(Mp16, tm_max))
    TM = _round_up(_cdiv(Mp16, n_m), 16)
    Mp = TM * n_m
    if Mp != M:
        x = jnp.pad(x, ((0, Mp - M), (0, 0)))

    nk = Kp // TK
    grid = (Mp // TM, Np // TN, nk)
    cost = pl.CostEstimate(
        flops=2 * Mp * Np * Kp,
        transcendentals=0,
        bytes_accessed=(x.dtype.itemsize * Mp * Kp
                        + w.dtype.itemsize * Kp * Np
                        + 4 * Np
                        + jnp.dtype(out_dtype).itemsize * Mp * Np),
    )

    in_specs = [
        pl.BlockSpec((TM, TK), lambda i, j, k: (i, k)),
        pl.BlockSpec((TK, TN), lambda i, j, k: (k, j)),
        pl.BlockSpec((1, TN), lambda i, j, k: (0, j)),
    ]
    out_spec = pl.BlockSpec((TM, TN), lambda i, j, k: (i, j))

    if nk == 1:
        kernel = _mm_bias_relu_kernel
        scratch = []
    else:
        kernel = _mm_bias_relu_acc_kernel
        scratch = [pltpu.VMEM((TM, TN), jnp.float32)]

    out = pl.pallas_call(
        kernel,
        out_shape=jax.ShapeDtypeStruct((Mp, Np), out_dtype),
        grid_spec=pltpu.PrefetchScalarGridSpec(
            num_scalar_prefetch=0,
            grid=grid,
            in_specs=in_specs,
            out_specs=out_spec,
            scratch_shapes=scratch,
        ),
        compiler_params=pltpu.CompilerParams(
            dimension_semantics=("parallel", "parallel", "arbitrary"),
            vmem_limit_bytes=48 * 1024 * 1024,
        ),
        cost_estimate=cost,
    )(x, w, b.reshape(1, Np))

    if Mp != M or Np != n_out:
        out = out[:M, :n_out]
    return out


# ------------------------------- JAX glue --------------------------------- #

def _im2col(x_nhwc, k, s):
    """(B,H,W,C) -> (B*Ho*Wo, k*k*C) patches, column index = (kh*k+kw)*C + c.
    Built by concatenating strided slices along the channel axis; dtype is
    preserved (bf16 activations -> bf16 patches)."""
    B, H, W, C = x_nhwc.shape
    Ho = (H - k) // s + 1
    Wo = (W - k) // s + 1
    cols = [x_nhwc[:, i:i + s * Ho:s, j:j + s * Wo:s, :]
            for i in range(k) for j in range(k)]
    p = jnp.concatenate(cols, axis=-1)               # (B, Ho, Wo, k*k*C)
    return p.reshape(B * Ho * Wo, k * k * C), Ho, Wo


def conv2d_relu(x_nhwc, w_mat, b, k, s, n_keep):
    """x:(B,H,W,Cin_keep) bf16; w_mat:(k*k*Cin_keep, Cout_lane) bf16
    -> (B,Ho,Wo,n_keep) bf16 where n_keep = round_up(cout, 16)."""
    B = x_nhwc.shape[0]
    patches, Ho, Wo = _im2col(x_nhwc, k, s)
    y = matmul_bias_relu(patches, w_mat, b, n_out=n_keep, out_dtype=jnp.bfloat16)
    return y.reshape(B, Ho, Wo, n_keep)


def prepare_params(conv_params, fc_params, obs_shape):
    """One-time repack of torch-layout f32 parameters into matmul-ready layout.

    * conv: OIHW -> (kh,kw,cin,cout) -> (k*k*cin_keep, cout_lane) bf16; cin is
      padded to the previous layer's carried channel count (multiple of 16),
      cout is padded to a multiple of 128 for the lane-dense kernel output but
      only round_up(cout, 16) channels are carried to the next layer.
    * fc: transposed, input columns permuted from NCHW-flatten order to the
      carried-NHWC-flatten order, output padded to a multiple of 128, bf16.
    Biases stay f32 (added in the f32 epilogue).
    """
    in_c, h, w = obs_shape
    cin_pad0 = _round_up(in_c, 16)
    prev_keep = cin_pad0
    last_cout = in_c

    conv_prepped = []
    for (W, b, s) in conv_params:
        cout, cin, k, _ = W.shape
        cout_keep = _round_up(cout, 16)       # carried to the next layer
        cout_lane = _round_up(cout, 128)      # lane-dense kernel output
        Wt = jnp.transpose(W, (2, 3, 1, 0))   # (k, k, cin, cout)
        Wt = jnp.pad(Wt, ((0, 0), (0, 0),
                          (0, prev_keep - cin), (0, cout_lane - cout)))
        w_mat = Wt.reshape(k * k * prev_keep, cout_lane).astype(jnp.bfloat16)
        b_pad = jnp.pad(b, (0, cout_lane - cout)).astype(jnp.float32)
        conv_prepped.append((w_mat, b_pad, k, s, cout_keep))
        prev_keep = cout_keep
        last_cout = cout
        h = (h - k) // s + 1
        w = (w - k) // s + 1

    fcW, fcb = fc_params                      # fcW: (feat, cout*h*w)
    feat = fcW.shape[0]
    feat_lane = _round_up(feat, 128)
    Wt = fcW.reshape(feat, last_cout, h, w)
    Wt = jnp.transpose(Wt, (2, 3, 1, 0))      # (h, w, cout, feat)
    Wt = jnp.pad(Wt, ((0, 0), (0, 0),
                      (0, prev_keep - last_cout), (0, feat_lane - feat)))
    fc_w_mat = Wt.reshape(h * w * prev_keep, feat_lane).astype(jnp.bfloat16)
    fc_b_pad = jnp.pad(fcb, (0, feat_lane - feat)).astype(jnp.float32)
    return cin_pad0, conv_prepped, (fc_w_mat, fc_b_pad, feat)


def pixel_encoder_forward(x_nchw, prepped):
    cin_pad, conv_layers, (fc_w, fc_b, feature_size) = prepped
    h = jnp.transpose(x_nchw, (0, 2, 3, 1)).astype(jnp.bfloat16)  # NCHW->NHWC
    C = h.shape[-1]
    if cin_pad != C:
        h = jnp.pad(h, ((0, 0), (0, 0), (0, 0), (0, cin_pad - C)))
    for (w_mat, b, k, s, n_keep) in conv_layers:
        h = conv2d_relu(h, w_mat, b, k, s, n_keep)   # relu(conv(h))
    h = h.reshape(h.shape[0], -1)                    # free NHWC flatten
    return matmul_bias_relu(h, fc_w, fc_b, n_out=feature_size,
                            out_dtype=jnp.float32)   # relu(fc(h))


# ------------------------- deterministic parameters ------------------------ #

def init_params(key, obs_shape, filters, feature_size):
    conv_params = []
    in_c, h, w = obs_shape
    for (out_c, k, s) in filters:
        key, k1, k2 = jax.random.split(key, 3)
        bound = 1.0 / jnp.sqrt(in_c * k * k)
        W = jax.random.uniform(k1, (out_c, in_c, k, k), jnp.float32, -bound, bound)
        b = jax.random.uniform(k2, (out_c,), jnp.float32, -bound, bound)
        conv_params.append((W, b, s))
        in_c = out_c
        h = (h - k) // s + 1
        w = (w - k) // s + 1
    lin_in = in_c * h * w
    key, k1, k2 = jax.random.split(key, 3)
    bound = 1.0 / jnp.sqrt(lin_in)
    fcW = jax.random.uniform(k1, (feature_size, lin_in), jnp.float32, -bound, bound)
    fcb = jax.random.uniform(k2, (feature_size,), jnp.float32, -bound, bound)
    return conv_params, (fcW, fcb)


# ------------------------------- reference -------------------------------- #

def reference_forward(x, conv_params, fc_params):
    h = x
    for (W, b, s) in conv_params:
        h = jax.lax.conv_general_dilated(
            h, W, (s, s), "VALID",
            dimension_numbers=("NCHW", "OIHW", "NCHW"))
        h = jax.nn.relu(h + b[None, :, None, None])
    h = h.reshape(h.shape[0], -1)
    fcW, fcb = fc_params
    return jax.nn.relu(h @ fcW.T + fcb)


if __name__ == "__main__":
    # Small but shape-consistent config (filters / feature_size are ctor args).
    obs_shape = (4, 16, 16)                            # (C, H, W)
    filters = [(8, 3, 2), (16, 3, 2), (16, 3, 1)]      # 16 -> 7 -> 3 -> 1
    feature_size = 32

    key = jax.random.PRNGKey(0)
    key, pkey, xkey = jax.random.split(key, 3)
    conv_params, fc_params = init_params(pkey, obs_shape, filters, feature_size)
    prepped = prepare_params(conv_params, fc_params, obs_shape)

    x = jax.random.uniform(xkey, (2,) + obs_shape, jnp.float32)

    forward = jax.jit(functools.partial(pixel_encoder_forward, prepped=prepped))
    out = jax.block_until_ready(forward(x))

    ref = reference_forward(x, conv_params, fc_params)
    assert out.shape == (2, feature_size), out.shape
    # bf16 MXU operands (f32 accumulation): loosened tolerance vs f32 reference.
    assert jnp.allclose(out, ref, atol=6e-2, rtol=6e-2), \
        float(jnp.max(jnp.abs(out - ref)))

    # Also exercise the K-tiled accumulator path (grid k-axis > 1).
    key, ka, kb_, kc = jax.random.split(key, 4)
    xb = jax.random.normal(ka, (64, 4096), jnp.float32).astype(jnp.bfloat16)
    wb = (0.02 * jax.random.normal(kb_, (4096, 256), jnp.float32)).astype(jnp.bfloat16)
    bb = 0.1 * jax.random.normal(kc, (256,), jnp.float32)
    yb = jax.block_until_ready(jax.jit(matmul_bias_relu)(xb, wb, bb))
    yb_ref = jax.nn.relu(xb.astype(jnp.float32) @ wb.astype(jnp.float32) + bb)
    assert jnp.allclose(yb, yb_ref, atol=2e-2, rtol=2e-2), \
        float(jnp.max(jnp.abs(yb - yb_ref)))

    print("KERNEL_OK")
</pallas_src>

<mosaic_0001>
module attributes {stable_mosaic.version = 11 : i64} {
  func.func @_mm_bias_relu_kernel(%arg0: i32, %arg1: i32, %arg2: i32, %arg3: memref<64x144xbf16, #tpu.memory_space<vmem>>, %arg4: memref<144x128xbf16, #tpu.memory_space<vmem>>, %arg5: memref<1x128xf32, #tpu.memory_space<vmem>>, %arg6: memref<64x128xbf16, #tpu.memory_space<vmem>>) attributes {dimension_semantics = [#tpu.dimension_semantics<parallel>, #tpu.dimension_semantics<parallel>, #tpu.dimension_semantics<arbitrary>], iteration_bounds = array<i64: 2, 1, 1>, scalar_prefetch = 0 : i64, scratch_operands = 0 : i64, tpu.core_type = #tpu.core_type<tc>, window_params = [{transform_indices = @transform_0, window_bounds = array<i64: 64, 144>}, {transform_indices = @transform_1, window_bounds = array<i64: 144, 128>}, {transform_indices = @transform_2, window_bounds = array<i64: 1, 128>}, {transform_indices = @transform_3, window_bounds = array<i64: 64, 128>}]} {
    %c0 = arith.constant 0 : index
    %c0_0 = arith.constant 0 : index
    %0 = vector.load %arg3[%c0, %c0_0] : memref<64x144xbf16, #tpu.memory_space<vmem>>, vector<64x144xbf16>
    %c0_1 = arith.constant 0 : index
    %c0_2 = arith.constant 0 : index
    %1 = vector.load %arg4[%c0_1, %c0_2] : memref<144x128xbf16, #tpu.memory_space<vmem>>, vector<144x128xbf16>
    %cst = arith.constant dense<0.000000e+00> : vector<64x128xf32>
    %2 = tpu.matmul %0, %1, %cst {dimension_numbers = #tpu.dot_dimension_numbers<[1], [0], [0], [1], [0, 0, 1, 1], [], []>} : vector<64x144xbf16>, vector<144x128xbf16>, vector<64x128xf32> -> vector<64x128xf32>
    %c0_3 = arith.constant 0 : index
    %c0_4 = arith.constant 0 : index
    %3 = vector.load %arg5[%c0_3, %c0_4] : memref<1x128xf32, #tpu.memory_space<vmem>>, vector<1x128xf32>
    %4 = vector.broadcast %3 : vector<1x128xf32> to vector<64x128xf32>
    %5 = arith.addf %2, %4 : vector<64x128xf32>
    %cst_5 = arith.constant 0.000000e+00 : f32
    %6 = vector.broadcast %cst_5 : f32 to vector<64x128xf32>
    %7 = arith.maximumf %5, %6 : vector<64x128xf32>
    %8 = arith.truncf %7 : vector<64x128xf32> to vector<64x128xbf16>
    %c0_6 = arith.constant 0 : index
    %c0_7 = arith.constant 0 : index
    %9 = vector.load %arg6[%c0_6, %c0_7] : memref<64x128xbf16, #tpu.memory_space<vmem>>, vector<64x128xbf16>
    tpu.vector_store %arg6[%c0_6, %c0_7], %8 {strides = array<i32>} : memref<64x128xbf16, #tpu.memory_space<vmem>>, vector<64x128xbf16>,
    return
  }
  func.func @transform_0(%arg0: i32, %arg1: i32, %arg2: i32) -> (i32, i32) {
    %c0_i32 = arith.constant 0 : i32
    return %arg0, %arg2 : i32, i32
  }
  func.func @transform_1(%arg0: i32, %arg1: i32, %arg2: i32) -> (i32, i32) {
    %c0_i32 = arith.constant 0 : i32
    return %arg2, %arg1 : i32, i32
  }
  func.func @transform_2(%arg0: i32, %arg1: i32, %arg2: i32) -> (i32, i32) {
    %c0_i32 = arith.constant 0 : i32
    %c0_i32_0 = arith.constant 0 : i32
    return %c0_i32, %arg1 : i32, i32
  }
  func.func @transform_3(%arg0: i32, %arg1: i32, %arg2: i32) -> (i32, i32) {
    %c0_i32 = arith.constant 0 : i32
    return %arg0, %arg1 : i32, i32
  }
}

module attributes {stable_mosaic.version = 11 : i64} {
  func.func @_mm_bias_relu_kernel(%arg0: i32, %arg1: i32, %arg2: i32, %arg3: memref<16x144xbf16, #tpu.memory_space<vmem>>, %arg4: memref<144x128xbf16, #tpu.memory_space<vmem>>, %arg5: memref<1x128xf32, #tpu.memory_space<vmem>>, %arg6: memref<16x128xbf16, #tpu.memory_space<vmem>>) attributes {dimension_semantics = [#tpu.dimension_semantics<parallel>, #tpu.dimension_semantics<parallel>, #tpu.dimension_semantics<arbitrary>], iteration_bounds = array<i64: 2, 1, 1>, scalar_prefetch = 0 : i64, scratch_operands = 0 : i64, tpu.core_type = #tpu.core_type<tc>, window_params = [{transform_indices = @transform_0, window_bounds = array<i64: 16, 144>}, {transform_indices = @transform_1, window_bounds = array<i64: 144, 128>}, {transform_indices = @transform_2, window_bounds = array<i64: 1, 128>}, {transform_indices = @transform_3, window_bounds = array<i64: 16, 128>}]} {
    %c0 = arith.constant 0 : index
    %c0_0 = arith.constant 0 : index
    %0 = vector.load %arg3[%c0, %c0_0] : memref<16x144xbf16, #tpu.memory_space<vmem>>, vector<16x144xbf16>
    %c0_1 = arith.constant 0 : index
    %c0_2 = arith.constant 0 : index
    %1 = vector.load %arg4[%c0_1, %c0_2] : memref<144x128xbf16, #tpu.memory_space<vmem>>, vector<144x128xbf16>
    %cst = arith.constant dense<0.000000e+00> : vector<16x128xf32>
    %2 = tpu.matmul %0, %1, %cst {dimension_numbers = #tpu.dot_dimension_numbers<[1], [0], [0], [1], [0, 0, 1, 1], [], []>} : vector<16x144xbf16>, vector<144x128xbf16>, vector<16x128xf32> -> vector<16x128xf32>
    %c0_3 = arith.constant 0 : index
    %c0_4 = arith.constant 0 : index
    %3 = vector.load %arg5[%c0_3, %c0_4] : memref<1x128xf32, #tpu.memory_space<vmem>>, vector<1x128xf32>
    %4 = vector.broadcast %3 : vector<1x128xf32> to vector<16x128xf32>
    %5 = arith.addf %2, %4 : vector<16x128xf32>
    %cst_5 = arith.constant 0.000000e+00 : f32
    %6 = vector.broadcast %cst_5 : f32 to vector<16x128xf32>
    %7 = arith.maximumf %5, %6 : vector<16x128xf32>
    %8 = arith.truncf %7 : vector<16x128xf32> to vector<16x128xbf16>
    %c0_6 = arith.constant 0 : index
    %c0_7 = arith.constant 0 : index
    %9 = vector.load %arg6[%c0_6, %c0_7] : memref<16x128xbf16, #tpu.memory_space<vmem>>, vector<16x128xbf16>
    tpu.vector_store %arg6[%c0_6, %c0_7], %8 {strides = array<i32>} : memref<16x128xbf16, #tpu.memory_space<vmem>>, vector<16x128xbf16>,
    return
  }
  func.func @transform_0(%arg0: i32, %arg1: i32, %arg2: i32) -> (i32, i32) {
    %c0_i32 = arith.constant 0 : i32
    return %arg0, %arg2 : i32, i32
  }
  func.func @transform_1(%arg0: i32, %arg1: i32, %arg2: i32) -> (i32, i32) {
    %c0_i32 = arith.constant 0 : i32
    return %arg2, %arg1 : i32, i32
  }
  func.func @transform_2(%arg0: i32, %arg1: i32, %arg2: i32) -> (i32, i32) {
    %c0_i32 = arith.constant 0 : i32
    %c0_i32_0 = arith.constant 0 : i32
    return %c0_i32, %arg1 : i32, i32
  }
  func.func @transform_3(%arg0: i32, %arg1: i32, %arg2: i32) -> (i32, i32) {
    %c0_i32 = arith.constant 0 : i32
    return %arg0, %arg1 : i32, i32
  }
}

module attributes {stable_mosaic.version = 11 : i64} {
  func.func @_mm_bias_relu_kernel(%arg0: i32, %arg1: i32, %arg2: i32, %arg3: memref<16x144xbf16, #tpu.memory_space<vmem>>, %arg4: memref<144x128xbf16, #tpu.memory_space<vmem>>, %arg5: memref<1x128xf32, #tpu.memory_space<vmem>>, %arg6: memref<16x128xbf16, #tpu.memory_space<vmem>>) attributes {dimension_semantics = [#tpu.dimension_semantics<parallel>, #tpu.dimension_semantics<parallel>, #tpu.dimension_semantics<arbitrary>], iteration_bounds = array<i64: 1, 1, 1>, scalar_prefetch = 0 : i64, scratch_operands = 0 : i64, tpu.core_type = #tpu.core_type<tc>, window_params = [{transform_indices = @transform_0, window_bounds = array<i64: 16, 144>}, {transform_indices = @transform_1, window_bounds = array<i64: 144, 128>}, {transform_indices = @transform_2, window_bounds = array<i64: 1, 128>}, {transform_indices = @transform_3, window_bounds = array<i64: 16, 128>}]} {
    %c0 = arith.constant 0 : index
    %c0_0 = arith.constant 0 : index
    %0 = vector.load %arg3[%c0, %c0_0] : memref<16x144xbf16, #tpu.memory_space<vmem>>, vector<16x144xbf16>
    %c0_1 = arith.constant 0 : index
    %c0_2 = arith.constant 0 : index
    %1 = vector.load %arg4[%c0_1, %c0_2] : memref<144x128xbf16, #tpu.memory_space<vmem>>, vector<144x128xbf16>
    %cst = arith.constant dense<0.000000e+00> : vector<16x128xf32>
    %2 = tpu.matmul %0, %1, %cst {dimension_numbers = #tpu.dot_dimension_numbers<[1], [0], [0], [1], [0, 0, 1, 1], [], []>} : vector<16x144xbf16>, vector<144x128xbf16>, vector<16x128xf32> -> vector<16x128xf32>
    %c0_3 = arith.constant 0 : index
    %c0_4 = arith.constant 0 : index
    %3 = vector.load %arg5[%c0_3, %c0_4] : memref<1x128xf32, #tpu.memory_space<vmem>>, vector<1x128xf32>
    %4 = vector.broadcast %3 : vector<1x128xf32> to vector<16x128xf32>
    %5 = arith.addf %2, %4 : vector<16x128xf32>
    %cst_5 = arith.constant 0.000000e+00 : f32
    %6 = vector.broadcast %cst_5 : f32 to vector<16x128xf32>
    %7 = arith.maximumf %5, %6 : vector<16x128xf32>
    %8 = arith.truncf %7 : vector<16x128xf32> to vector<16x128xbf16>
    %c0_6 = arith.constant 0 : index
    %c0_7 = arith.constant 0 : index
    %9 = vector.load %arg6[%c0_6, %c0_7] : memref<16x128xbf16, #tpu.memory_space<vmem>>, vector<16x128xbf16>
    tpu.vector_store %arg6[%c0_6, %c0_7], %8 {strides = array<i32>} : memref<16x128xbf16, #tpu.memory_space<vmem>>, vector<16x128xbf16>,
    return
  }
  func.func @transform_0(%arg0: i32, %arg1: i32, %arg2: i32) -> (i32, i32) {
    %c0_i32 = arith.constant 0 : i32
    return %arg0, %arg2 : i32, i32
  }
  func.func @transform_1(%arg0: i32, %arg1: i32, %arg2: i32) -> (i32, i32) {
    %c0_i32 = arith.constant 0 : i32
    return %arg2, %arg1 : i32, i32
  }
  func.func @transform_2(%arg0: i32, %arg1: i32, %arg2: i32) -> (i32, i32) {
    %c0_i32 = arith.constant 0 : i32
    %c0_i32_0 = arith.constant 0 : i32
    return %c0_i32, %arg1 : i32, i32
  }
  func.func @transform_3(%arg0: i32, %arg1: i32, %arg2: i32) -> (i32, i32) {
    %c0_i32 = arith.constant 0 : i32
    return %arg0, %arg1 : i32, i32
  }
}

module attributes {stable_mosaic.version = 11 : i64} {
  func.func @_mm_bias_relu_kernel(%arg0: i32, %arg1: i32, %arg2: i32, %arg3: memref<16x16xbf16, #tpu.memory_space<vmem>>, %arg4: memref<16x128xbf16, #tpu.memory_space<vmem>>, %arg5: memref<1x128xf32, #tpu.memory_space<vmem>>, %arg6: memref<16x128xf32, #tpu.memory_space<vmem>>) attributes {dimension_semantics = [#tpu.dimension_semantics<parallel>, #tpu.dimension_semantics<parallel>, #tpu.dimension_semantics<arbitrary>], iteration_bounds = array<i64: 1, 1, 1>, scalar_prefetch = 0 : i64, scratch_operands = 0 : i64, tpu.core_type = #tpu.core_type<tc>, window_params = [{transform_indices = @transform_0, window_bounds = array<i64: 16, 16>}, {transform_indices = @transform_1, window_bounds = array<i64: 16, 128>}, {transform_indices = @transform_2, window_bounds = array<i64: 1, 128>}, {transform_indices = @transform_3, window_bounds = array<i64: 16, 128>}]} {
    %c0 = arith.constant 0 : index
    %c0_0 = arith.constant 0 : index
    %0 = vector.load %arg3[%c0, %c0_0] : memref<16x16xbf16, #tpu.memory_space<vmem>>, vector<16x16xbf16>
    %c0_1 = arith.constant 0 : index
    %c0_2 = arith.constant 0 : index
    %1 = vector.load %arg4[%c0_1, %c0_2] : memref<16x128xbf16, #tpu.memory_space<vmem>>, vector<16x128xbf16>
    %cst = arith.constant dense<0.000000e+00> : vector<16x128xf32>
    %2 = tpu.matmul %0, %1, %cst {dimension_numbers = #tpu.dot_dimension_numbers<[1], [0], [0], [1], [0, 0, 1, 1], [], []>} : vector<16x16xbf16>, vector<16x128xbf16>, vector<16x128xf32> -> vector<16x128xf32>
    %c0_3 = arith.constant 0 : index
    %c0_4 = arith.constant 0 : index
    %3 = vector.load %arg5[%c0_3, %c0_4] : memref<1x128xf32, #tpu.memory_space<vmem>>, vector<1x128xf32>
    %4 = vector.broadcast %3 : vector<1x128xf32> to vector<16x128xf32>
    %5 = arith.addf %2, %4 : vector<16x128xf32>
    %cst_5 = arith.constant 0.000000e+00 : f32
    %6 = vector.broadcast %cst_5 : f32 to vector<16x128xf32>
    %7 = arith.maximumf %5, %6 : vector<16x128xf32>
    %c0_6 = arith.constant 0 : index
    %c0_7 = arith.constant 0 : index
    %8 = vector.load %arg6[%c0_6, %c0_7] : memref<16x128xf32, #tpu.memory_space<vmem>>, vector<16x128xf32>
    tpu.vector_store %arg6[%c0_6, %c0_7], %7 {strides = array<i32>} : memref<16x128xf32, #tpu.memory_space<vmem>>, vector<16x128xf32>,
    return
  }
  func.func @transform_0(%arg0: i32, %arg1: i32, %arg2: i32) -> (i32, i32) {
    %c0_i32 = arith.constant 0 : i32
    return %arg0, %arg2 : i32, i32
  }
  func.func @transform_1(%arg0: i32, %arg1: i32, %arg2: i32) -> (i32, i32) {
    %c0_i32 = arith.constant 0 : i32
    return %arg2, %arg1 : i32, i32
  }
  func.func @transform_2(%arg0: i32, %arg1: i32, %arg2: i32) -> (i32, i32) {
    %c0_i32 = arith.constant 0 : i32
    %c0_i32_0 = arith.constant 0 : i32
    return %c0_i32, %arg1 : i32, i32
  }
  func.func @transform_3(%arg0: i32, %arg1: i32, %arg2: i32) -> (i32, i32) {
    %c0_i32 = arith.constant 0 : i32
    return %arg0, %arg1 : i32, i32
  }
}

</mosaic_0001>

<llo_original>
// kernel: pixel_encoder_forward.4
$region0: #{pixel_encoder_forward.4}
  #allocation0 [shape = 'u32[]', space=smem, size = 0x4, offset = 0x4, fixed_abs, tag = 'smem constant byte address 0x4 - core index']
  #allocation1 [shape = 'u32[72,128]{1,0:T(1,128)}', space=vmem, size = 0x9000, scoped, tag = 'internal scratch']
  %s0 = inlined_call_operand.vmem [shape: bf16[128,144], index: 0, kind: input, shape index: {}]
  %s1 = inlined_call_operand.vmem [shape: bf16[144,128], index: 1, kind: input, shape index: {}]
  %s2 = inlined_call_operand.vmem [shape: f32[1,128], index: 2, kind: input, shape index: {}]
  %s3 = inlined_call_operand.vmem [shape: bf16[128,128], index: 3, kind: output, shape index: {}]
  %s4 = sld [smem:[#allocation0]]
  $region45: #{pixel_encoder_forward.4} parent=0
    _
  %s6 = ssub.s32 1, %s4
  %s7 = scalar_select 0, %s6, %s4
  loop: start=0, step=1, limit=4
  $region2: #{pixel_encoder_forward.4} parent=0 // loop_pre_header
    _
  $region3: #{pixel_encoder_forward.4} parent=0 // loop_header
    %s9 = sphi 0, %s13
    %p10 = scmp.ge.s32.totalorder %s9, 4
    %s16 = sphi 0, %s35
    %s17 = sphi 0, %s31
    %s18 = sphi 0, %s27
    %s19 = sphi 0, %s16
    %s20 = sphi 0, %s17
    %s21 = sphi 0, %s18
    %s22 = sphi 0, %s19
    %s23 = sphi 0, %s20
    %s24 = sphi 0, %s21
    %s40 = sphi 0, %s42
    %s43 = sphi 0, %s40
    %s44 = sphi 0, %s43
    %s60 = sphi 0, %s44
    %s68 = sphi 0, %s70
    %s71 = sphi 0, %s68
    %s72 = sphi 0, %s71
    %s88 = sphi 0, %s72
    %s94 = sphi 0, %s96
    %s97 = sphi 0, %s94
    %s98 = sphi 0, %s97
    %s114 = sphi 0, %s98
    %s122 = sphi 0, %s124
    %s125 = sphi 0, %s122
    %s126 = sphi 0, %s125
    %s142 = sphi 0, %s126
  $region4: #{pixel_encoder_forward.4} parent=0 // loop_header_branch
    %12 = sbr.rel (%p10) target = $region8
  $region5: #{pixel_encoder_forward.4} parent=0 // loop_body
    %s14 = ssub.s32 %s9, 1
    %s15 = ssub.s32 %s9, 2
    %s25 = sadd.s32 1, %s18
    %p26 = scmp.ge.s32.totalorder %s25, 1
    %s27 = scalar_select %p26, 0, %s25
    %s28 = sadd.s32 1, %s17
    %s29 = scalar_select %p26, %s28, %s17
    %p30 = scmp.ge.s32.totalorder %s29, 1
    %s31 = scalar_select %p30, 0, %s29
    %s32 = sadd.s32 1, %s16
    %s33 = scalar_select %p30, %s32, %s16
    %p34 = scmp.ge.s32.totalorder %s33, 2
    %s35 = scalar_select %p34, 0, %s33
    %s36 = ssub.s32 %s16, %s35
    %s37 = ssub.s32 %s18, %s27
    %s38 = sor.u32 %s36, %s37
    %p39 = scmp.eq.s32.totalorder %s38, 0
    %s41 = sadd.s32 %s40, 1
    %s42 = scalar_select %p39, %s40, %s41
    %p45 = pneg %p39
    %p46 = scmp.eq.s32.totalorder %s9, 1
    %p47 = por %p45, %p46
    %p48 = scmp.ne.s32.totalorder %s40, %s43
    %p49 = scmp.eq.s32.totalorder %s9, 0
    %p50 = por %p48, %p49
    %p51 = scmp.ne.s32.totalorder %s40, %s43
    %p52 = scmp.eq.s32.totalorder %s14, 1
    %p53 = por %p51, %p52
    %p54 = scmp.ne.s32.totalorder %s43, %s44
    %p55 = scmp.eq.s32.totalorder %s14, 0
    %p56 = por %p54, %p55
    %p57 = scmp.ne.s32.totalorder %s43, %s44
    %p58 = scmp.eq.s32.totalorder %s15, 1
    %p59 = por %p57, %p58
    %p61 = scmp.ne.s32.totalorder %s44, %s60
    %p62 = scmp.eq.s32.totalorder %s15, 0
    %p63 = por %p61, %p62
    %s64 = ssub.s32 %s18, %s27
    %s65 = ssub.s32 %s17, %s31
    %s66 = sor.u32 %s64, %s65
    %p67 = scmp.eq.s32.totalorder %s66, 0
    %s69 = sadd.s32 %s68, 1
    %s70 = scalar_select %p67, %s68, %s69
    %p73 = pneg %p67
    %p74 = scmp.eq.s32.totalorder %s9, 1
    %p75 = por %p73, %p74
    %p76 = scmp.ne.s32.totalorder %s68, %s71
    %p77 = scmp.eq.s32.totalorder %s9, 0
    %p78 = por %p76, %p77
    %p79 = scmp.ne.s32.totalorder %s68, %s71
    %p80 = scmp.eq.s32.totalorder %s14, 1
    %p81 = por %p79, %p80
    %p82 = scmp.ne.s32.totalorder %s71, %s72
    %p83 = scmp.eq.s32.totalorder %s14, 0
    %p84 = por %p82, %p83
    %p85 = scmp.ne.s32.totalorder %s71, %s72
    %p86 = scmp.eq.s32.totalorder %s15, 1
    %p87 = por %p85, %p86
    %p89 = scmp.ne.s32.totalorder %s72, %s88
    %p90 = scmp.eq.s32.totalorder %s15, 0
    %p91 = por %p89, %p90
    %s92 = ssub.s32 %s17, %s31
    %p93 = scmp.eq.s32.totalorder %s92, 0
    %s95 = sadd.s32 %s94, 1
    %s96 = scalar_select %p93, %s94, %s95
    %p99 = pneg %p93
    %p100 = scmp.eq.s32.totalorder %s9, 1
    %p101 = por %p99, %p100
    %p102 = scmp.ne.s32.totalorder %s94, %s97
    %p103 = scmp.eq.s32.totalorder %s9, 0
    %p104 = por %p102, %p103
    %p105 = scmp.ne.s32.totalorder %s94, %s97
    %p106 = scmp.eq.s32.totalorder %s14, 1
    %p107 = por %p105, %p106
    %p108 = scmp.ne.s32.totalorder %s97, %s98
    %p109 = scmp.eq.s32.totalorder %s14, 0
    %p110 = por %p108, %p109
    %p111 = scmp.ne.s32.totalorder %s97, %s98
    %p112 = scmp.eq.s32.totalorder %s15, 1
    %p113 = por %p111, %p112
    %p115 = scmp.ne.s32.totalorder %s98, %s114
    %p116 = scmp.eq.s32.totalorder %s15, 0
    %p117 = por %p115, %p116
    %s118 = ssub.s32 %s16, %s35
    %s119 = ssub.s32 %s17, %s31
    %s120 = sor.u32 %s118, %s119
    %p121 = scmp.eq.s32.totalorder %s120, 0
    %s123 = sadd.s32 %s122, 1
    %s124 = scalar_select %p121, %s122, %s123
    %p127 = pneg %p121
    %p128 = scmp.eq.s32.totalorder %s9, 1
    %p129 = por %p127, %p128
    %p130 = scmp.ne.s32.totalorder %s122, %s125
    %p131 = scmp.eq.s32.totalorder %s9, 0
    %p132 = por %p130, %p131
    %p133 = scmp.ne.s32.totalorder %s122, %s125
    %p134 = scmp.eq.s32.totalorder %s14, 1
    %p135 = por %p133, %p134
    %p136 = scmp.ne.s32.totalorder %s125, %s126
    %p137 = scmp.eq.s32.totalorder %s14, 0
    %p138 = por %p136, %p137
    %p139 = scmp.ne.s32.totalorder %s125, %s126
    %p140 = scmp.eq.s32.totalorder %s15, 1
    %p141 = por %p139, %p140
    %p143 = scmp.ne.s32.totalorder %s126, %s142
    %p144 = scmp.eq.s32.totalorder %s15, 0
    %p145 = por %p143, %p144
    %p146 = scmp.le.s32.totalorder 1, %s9
    %p147 = scmp.lt.s32.totalorder %s9, 3
    %p148 = pnand %p146, %p147
    %p149 = pneg %p148
    // Predicated region
    $region9: #{pixel_encoder_forward.4} parent=5 // pred_check
      _
    $region10: #{pixel_encoder_forward.4} parent=5 // pred_check_branch
      %151 = sbr.rel (%p148) target = $region12
    $region11: #{pixel_encoder_forward.4} parent=5 // pred_region
      %s152 = ssub.s32 %s9, 1
      // Predicated region
      $region13: #{pixel_encoder_forward.4} parent=11 // pred_check
        %p153 = pneg %p84
      $region14: #{pixel_encoder_forward.4} parent=11 // pred_check_branch
        %155 = sbr.rel (%p153) target = $region16
      $region15: #{pixel_encoder_forward.4} parent=11 // pred_region
        %s156 = smul.u32 18, %s21
        %p157 = scmp.lt.s32.totalorder %s156, 17
        %s158 = scalar_select %p157, %s156, 17
        %p159 = scmp.lt.s32.totalorder %s20, 0
        %s160 = scalar_select %p159, %s20, 0
        %s161 = sadd.s32 %s160, %s158
        %s162 = smul.addr %s161, 4
        %s163 = scalar_lea.vmem %s1, %s162
        %s164 = smul.u32 18, %s21
      $region16: #{pixel_encoder_forward.4} parent=11 // pred_fallthru
        _
      // Predicated region
      $region17: #{pixel_encoder_forward.4} parent=11 // pred_check
        %p165 = pneg %p110
      $region18: #{pixel_encoder_forward.4} parent=11 // pred_check_branch
        %167 = sbr.rel (%p165) target = $region20
      $region19: #{pixel_encoder_forward.4} parent=11 // pred_region
        %p168 = scmp.lt.s32.totalorder %s20, 0
        %s169 = scalar_select %p168, %s20, 0
        %s170 = scalar_lea.vmem %s2, %s169
      $region20: #{pixel_encoder_forward.4} parent=11 // pred_fallthru
        _
    $region12: #{pixel_encoder_forward.4} parent=5 // pred_fallthru
      _
    %p171 = scmp.lt.s32.totalorder %s9, 2
    // Predicated region
    $region21: #{pixel_encoder_forward.4} parent=5 // pred_check
      %p172 = pneg %p171
    $region22: #{pixel_encoder_forward.4} parent=5 // pred_check_branch
      %174 = sbr.rel (%p172) target = $region24
    $region23: #{pixel_encoder_forward.4} parent=5 // pred_region
      // Predicated region
      $region25: #{pixel_encoder_forward.4} parent=23 // pred_check
        %p175 = pneg %p50
      $region26: #{pixel_encoder_forward.4} parent=23 // pred_check_branch
        %177 = sbr.rel (%p175) target = $region28
      $region27: #{pixel_encoder_forward.4} parent=23 // pred_region
        %s178 = smul.u32 8, %s16
        %s179 = smul.u32 2, %s18
        %p180 = scmp.lt.s32.totalorder %s178, 15
        %s181 = scalar_select %p180, %s178, 15
        %p182 = scmp.lt.s32.totalorder %s179, 1
        %s183 = scalar_select %p182, %s179, 1
        %s184 = smul.addr %s181, 2
        %s185 = sadd.s32 %s183, %s184
        %s186 = smul.addr %s185, 4
        %s187 = scalar_lea.vmem %s0, %s186
        %s188 = smul.u32 8, %s16
        %s189 = smul.u32 2, %s18
      $region28: #{pixel_encoder_forward.4} parent=23 // pred_fallthru
        _
    $region24: #{pixel_encoder_forward.4} parent=5 // pred_fallthru
      _
    %p190 = scmp.le.s32.totalorder 1, %s9
    %p191 = scmp.lt.s32.totalorder %s9, 3
    %p192 = pnand %p190, %p191
    %p193 = pneg %p192
    // Predicated region
    $region29: #{pixel_encoder_forward.4} parent=5 // pred_check
      _
    $region30: #{pixel_encoder_forward.4} parent=5 // pred_check_branch
      %195 = sbr.rel (%p192) target = $region32
    $region31: #{pixel_encoder_forward.4} parent=5 // pred_region
      %s196 = ssub.s32 %s9, 1
      %s197 = smul.u32 8, %s19
      %s198 = smul.u32 2, %s21
      %p199 = scmp.lt.s32.totalorder %s197, 15
      %s200 = scalar_select %p199, %s197, 15
      %p201 = scmp.lt.s32.totalorder %s198, 1
      %s202 = scalar_select %p201, %s198, 1
      %s203 = smul.addr %s200, 2
      %s204 = sadd.s32 %s202, %s203
      %s205 = smul.addr %s204, 4
      %s206 = scalar_lea.vmem %s0, %s205
      %p207 = pneg %p56
      %p208 = pneg %p53
      %s209 = smul.u32 18, %s21
      %p210 = scmp.lt.s32.totalorder %s209, 17
      %s211 = scalar_select %p210, %s209, 17
      %p212 = scmp.lt.s32.totalorder %s20, 0
      %s213 = scalar_select %p212, %s20, 0
      %s214 = sadd.s32 %s213, %s211
      %s215 = smul.addr %s214, 4
      %s216 = scalar_lea.vmem %s1, %s215
      %p217 = pneg %p84
      %p218 = pneg %p81
      %p219 = scmp.lt.s32.totalorder %s20, 0
      %s220 = scalar_select %p219, %s20, 0
      %s221 = scalar_lea.vmem %s2, %s220
      %p222 = pneg %p110
      %p223 = pneg %p107
      %p224 = pneg %p138
      %p225 = pneg %p135
      %s226 = smul.u32 8, %s19
      %p227 = scmp.lt.s32.totalorder %s226, 15
      %s228 = scalar_select %p227, %s226, 15
      %p229 = scmp.lt.s32.totalorder %s20, 0
      %s230 = scalar_select %p229, %s20, 0
      %s231 = sadd.s32 %s230, %s228
      %s232 = smul.addr %s231, 4
      %s233 = scalar_lea.vmem %s3, %s232
      %s234 = smul.u32 8, %s19
      %s235 = smul.u32 2, %s21
      %p236 = scmp.lt.s32.totalorder %s234, 15
      %s237 = scalar_select %p236, %s234, 15
      %p238 = scmp.lt.s32.totalorder %s235, 1
      %s239 = scalar_select %p238, %s235, 1
      %s240 = smul.addr %s237, 2
      %s241 = sadd.s32 %s239, %s240
      %s242 = smul.addr %s241, 4
      %s243 = scalar_lea.vmem %s0, %s242
      %s244 = smul.u32 8, %s19
      %s245 = smul.u32 2, %s21
      %s246 = smul.u32 18, %s21
      %p247 = scmp.lt.s32.totalorder %s246, 17
      %s248 = scalar_select %p247, %s246, 17
      %p249 = scmp.lt.s32.totalorder %s20, 0
      %s250 = scalar_select %p249, %s20, 0
      %s251 = sadd.s32 %s250, %s248
      %s252 = smul.addr %s251, 4
      %s253 = scalar_lea.vmem %s1, %s252
      %s254 = smul.u32 18, %s21
      %p255 = scmp.lt.s32.totalorder %s20, 0
      %s256 = scalar_select %p255, %s20, 0
      %s257 = scalar_lea.vmem %s2, %s256
      %s258 = smul.u32 8, %s19
      %p259 = scmp.lt.s32.totalorder %s258, 15
      %s260 = scalar_select %p259, %s258, 15
      %p261 = scmp.lt.s32.totalorder %s20, 0
      %s262 = scalar_select %p261, %s20, 0
      %s263 = sadd.s32 %s262, %s260
      %s264 = smul.addr %s263, 4
      %s265 = scalar_lea.vmem %s3, %s264
      %s266 = smul.u32 8, %s19
      %v268 = vld [vmem:[%s243] sm:$0xff]
      %v269 = vld [vmem:[%s243 + $0x8] sm:$0xff]
      %v270 = vld [vmem:[%s243 + $0x10] sm:$0xff]
      %v271 = vld [vmem:[%s243 + $0x18] sm:$0xff]
      %v272 = vld [vmem:[%s243 + $0x20] sm:$0xff]
      %v273 = vld [vmem:[%s243 + $0x28] sm:$0xff]
      %v274 = vld [vmem:[%s243 + $0x30] sm:$0xff]
      %v275 = vld [vmem:[%s243 + $0x38] sm:$0xff]
      %v276 = vld [vmem:[%s253] sm:$0xf]
      %v277 = vld [vmem:[%s253 + $0x4] sm:$0xf]
      %v278 = vld [vmem:[%s253 + $0x8] sm:$0xf]
      %v279 = vld [vmem:[%s253 + $0xc] sm:$0xf]
      %v280 = vld [vmem:[%s253 + $0x10] sm:$0xf]
      %v281 = vld [vmem:[%s253 + $0x14] sm:$0xf]
      %v282 = vld [vmem:[%s253 + $0x18] sm:$0xf]
      %v283 = vld [vmem:[%s253 + $0x1c] sm:$0xf]
      %v284 = vld [vmem:[%s253 + $0x20] sm:$0xf]
      %v285 = vld [vmem:[%s253 + $0x24] sm:$0xf]
      %v286 = vld [vmem:[%s253 + $0x28] sm:$0xf]
      %v287 = vld [vmem:[%s253 + $0x2c] sm:$0xf]
      %v288 = vld [vmem:[%s253 + $0x30] sm:$0xf]
      %v289 = vld [vmem:[%s253 + $0x34] sm:$0xf]
      %v290 = vld [vmem:[%s253 + $0x38] sm:$0xf]
      %v291 = vld [vmem:[%s253 + $0x3c] sm:$0xf]
      %v292 = vld [vmem:[%s253 + $0x40] sm:$0xf]
      %v293 = vld [vmem:[%s253 + $0x44] sm:$0xf]
      %v294 = vld [vmem:[%s257] sm:$0x1]
      %v296 = vperm.slane %v294, 0
      %v306 = vunpack.c.l.b16 %v268
      %v307 = vunpack.c.h.b16 %v268
      %v308 = vunpack.c.l.b16 %v269
      %v309 = vunpack.c.h.b16 %v269
      %v310 = vunpack.c.l.b16 %v270
      %v311 = vunpack.c.h.b16 %v270
      %v312 = vunpack.c.l.b16 %v271
      %v313 = vunpack.c.h.b16 %v271
      %v314 = vunpack.c.l.b16 %v272
      %v315 = vunpack.c.h.b16 %v272
      %v316 = vunpack.c.l.b16 %v273
      %v317 = vunpack.c.h.b16 %v273
      %v318 = vunpack.c.l.b16 %v274
      %v319 = vunpack.c.h.b16 %v274
      %v320 = vunpack.c.l.b16 %v275
      %v321 = vunpack.c.h.b16 %v275
      %v322 = vpack.c.b16 %v308, %v306
      %v323 = vpack.c.b16 %v309, %v307
      %v324 = vpack.c.b16 %v312, %v310
      %v325 = vpack.c.b16 %v313, %v311
      %v326 = vpack.c.b16 %v316, %v314
      %v327 = vpack.c.b16 %v317, %v315
      %v328 = vpack.c.b16 %v320, %v318
      %v329 = vpack.c.b16 %v321, %v319
      %v352 = vunpack.c.l.b16 %v276
      %v353 = vunpack.c.l.b16 %v277
      %v354 = vunpack.c.l.b16 %v278
      %v355 = vunpack.c.l.b16 %v279
      %v356 = vunpack.c.l.b16 %v280
      %v357 = vunpack.c.l.b16 %v281
      %v358 = vunpack.c.l.b16 %v282
      %v359 = vunpack.c.l.b16 %v283
      %v360 = vunpack.c.l.b16 %v284
      %v361 = vunpack.c.l.b16 %v285
      %v362 = vunpack.c.l.b16 %v286
      %v363 = vunpack.c.l.b16 %v287
      %v364 = vunpack.c.l.b16 %v288
      %v365 = vunpack.c.l.b16 %v289
      %v366 = vunpack.c.l.b16 %v290
      %v367 = vunpack.c.l.b16 %v291
      %v368 = vunpack.c.l.b16 %v292
      %v369 = vunpack.c.l.b16 %v293
      %v370 = vpack.c.b16 %v353, %v352
      %v371 = vpack.c.b16 %v355, %v354
      %v372 = vpack.c.b16 %v357, %v356
      %v373 = vpack.c.b16 %v359, %v358
      %v374 = vpack.c.b16 %v361, %v360
      %v375 = vpack.c.b16 %v363, %v362
      %v376 = vpack.c.b16 %v365, %v364
      %v377 = vpack.c.b16 %v367, %v366
      %v378 = vpack.c.b16 %v369, %v368
      %vm388 = vcmask 130048
      %v390 = vsel %vm388, %v323, 0
      %v393 = vsel %vm388, %v325, 0
      %v396 = vsel %vm388, %v327, 0
      %v399 = vsel %vm388, %v329, 0
      %401 = vmatpush.bf16.msra.mxu0 %v377
      %402 = vmatpush.bf16.msra.mxu0 %v376
      %403 = vmatpush.bf16.msra.mxu0 %v375
      %404 = vmatpush.bf16.msra.mxu0 %v374
      %405 = vmatpush.bf16.msra.mxu0 %v373
      %406 = vmatpush.bf16.msra.mxu0 %v372
      %407 = vmatpush.bf16.msra.mxu0 %v371
      %408 = vmatpush.bf16.msra.mxu0 %v370
      %409 = vmatmul.bf16.gmra.mxu0 %v322
      %v410 = vpop.f32.mrf.mxu0
      %v411 = vadd.f32 %v296, %v410
      %v412 = vpop.f32.mrf.mxu0
      %v413 = vadd.f32 %v296, %v412
      %414 = vmatmul.bf16.gmra.mxu0 %v324
      %v415 = vpop.f32.mrf.mxu0
      %v416 = vadd.f32 %v296, %v415
      %v417 = vpop.f32.mrf.mxu0
      %v418 = vadd.f32 %v296, %v417
      %419 = vmatmul.bf16.gmra.mxu0 %v326
      %v420 = vpop.f32.mrf.mxu0
      %v421 = vadd.f32 %v296, %v420
      %v422 = vpop.f32.mrf.mxu0
      %v423 = vadd.f32 %v296, %v422
      %424 = vmatmul.bf16.gmra.mxu0 %v328
      %v425 = vpop.f32.mrf.mxu0
      %v426 = vadd.f32 %v296, %v425
      %v427 = vpop.f32.mrf.mxu0
      %v428 = vadd.f32 %v296, %v427
      %429 = vdwg.mxu0
      %430 = vmatpush.bf16.msra.mxu0 0
      %431 = vmatpush.bf16.msra.mxu0 0
      %432 = vmatpush.bf16.msra.mxu0 0
      %433 = vmatpush.bf16.msra.mxu0 0
      %434 = vmatpush.bf16.msra.mxu0 0
      %435 = vmatpush.bf16.msra.mxu0 0
      %436 = vmatpush.bf16.msra.mxu0 0
      %437 = vmatpush.bf16.msra.mxu0 %v378
      %438 = vmatmul.bf16.gmra.mxu0 %v390
      %v439 = vpop.f32.mrf.mxu0
      %v440 = vadd.f32 %v411, %v439
      %v441 = vpop.f32.mrf.mxu0
      %v442 = vadd.f32 %v413, %v441
      %443 = vmatmul.bf16.gmra.mxu0 %v393
      %v444 = vpop.f32.mrf.mxu0
      %v445 = vadd.f32 %v416, %v444
      %v446 = vpop.f32.mrf.mxu0
      %v447 = vadd.f32 %v418, %v446
      %448 = vmatmul.bf16.gmra.mxu0 %v396
      %v449 = vpop.f32.mrf.mxu0
      %v450 = vadd.f32 %v421, %v449
      %v451 = vpop.f32.mrf.mxu0
      %v452 = vadd.f32 %v423, %v451
      %453 = vmatmul.bf16.gmra.mxu0 %v399
      %v454 = vpop.f32.mrf.mxu0
      %v455 = vadd.f32 %v426, %v454
      %v456 = vpop.f32.mrf.mxu0
      %v457 = vadd.f32 %v428, %v456
      %458 = vdwg.mxu0
      %v459 = vmax.f32 %v440, 0.0
      %v460 = vmax.f32 %v442, 0.0
      %v461 = vmax.f32 %v445, 0.0
      %v462 = vmax.f32 %v447, 0.0
      %v463 = vmax.f32 %v450, 0.0
      %v464 = vmax.f32 %v452, 0.0
      %v465 = vmax.f32 %v455, 0.0
      %v466 = vmax.f32 %v457, 0.0
      %v467 = vpack.c.bf16 %v459, %v459
      %v468 = vpack.c.bf16 %v460, %v460
      %v469 = vpack.c.bf16 %v461, %v461
      %v470 = vpack.c.bf16 %v462, %v462
      %v471 = vpack.c.bf16 %v463, %v463
      %v472 = vpack.c.bf16 %v464, %v464
      %v473 = vpack.c.bf16 %v465, %v465
      %v474 = vpack.c.bf16 %v466, %v466
      %475 = vst [vmem:[%s265] sm:$0xf] %v467
      %476 = vst [vmem:[%s265 + $0x4] sm:$0xf] %v468
      %477 = vst [vmem:[%s265 + $0x8] sm:$0xf] %v469
      %478 = vst [vmem:[%s265 + $0xc] sm:$0xf] %v470
      %479 = vst [vmem:[%s265 + $0x10] sm:$0xf] %v471
      %480 = vst [vmem:[%s265 + $0x14] sm:$0xf] %v472
      %481 = vst [vmem:[%s265 + $0x18] sm:$0xf] %v473
      %482 = vst [vmem:[%s265 + $0x1c] sm:$0xf] %v474
      %s483 = smul.u32 8, %s19
      %p484 = scmp.lt.s32.totalorder %s483, 15
      %s485 = scalar_select %p484, %s483, 15
      %p486 = scmp.lt.s32.totalorder %s20, 0
      %s487 = scalar_select %p486, %s20, 0
      %s488 = sadd.s32 %s487, %s485
      %s489 = smul.addr %s488, 4
      %s490 = scalar_lea.vmem %s3, %s489
      // Predicated region
      $region33: #{pixel_encoder_forward.4} parent=31 // pred_check
        %p491 = pneg %p135
      $region34: #{pixel_encoder_forward.4} parent=31 // pred_check_branch
        %493 = sbr.rel (%p491) target = $region36
      $region35: #{pixel_encoder_forward.4} parent=31 // pred_region
        %s494 = smul.u32 8, %s19
      $region36: #{pixel_encoder_forward.4} parent=31 // pred_fallthru
        _
    $region32: #{pixel_encoder_forward.4} parent=5 // pred_fallthru
      _
    %p495 = scmp.le.s32.totalorder 2, %s9
    // Predicated region
    $region37: #{pixel_encoder_forward.4} parent=5 // pred_check
      %p496 = pneg %p495
    $region38: #{pixel_encoder_forward.4} parent=5 // pred_check_branch
      %498 = sbr.rel (%p496) target = $region40
    $region39: #{pixel_encoder_forward.4} parent=5 // pred_region
      %s499 = ssub.s32 %s9, 2
      // Predicated region
      $region41: #{pixel_encoder_forward.4} parent=39 // pred_check
        %p500 = pneg %p141
      $region42: #{pixel_encoder_forward.4} parent=39 // pred_check_branch
        %502 = sbr.rel (%p500) target = $region44
      $region43: #{pixel_encoder_forward.4} parent=39 // pred_region
        %s503 = smul.u32 8, %s22
        %p504 = scmp.lt.s32.totalorder %s503, 15
        %s505 = scalar_select %p504, %s503, 15
        %p506 = scmp.lt.s32.totalorder %s23, 0
        %s507 = scalar_select %p506, %s23, 0
        %s508 = sadd.s32 %s507, %s505
        %s509 = smul.addr %s508, 4
        %s510 = scalar_lea.vmem %s3, %s509
      $region44: #{pixel_encoder_forward.4} parent=39 // pred_fallthru
        _
    $region40: #{pixel_encoder_forward.4} parent=5 // pred_fallthru
      _
  $region6: #{pixel_encoder_forward.4} parent=0 // loop_footer
    %s13 = sadd.s32 1, %s9
  $region7: #{pixel_encoder_forward.4} parent=0 // loop_footer_branch
    %8 = sbr.rel target = $region3
  $region8: #{pixel_encoder_forward.4} parent=0 // loop_exit
    _

// kernel: pixel_encoder_forward.5
$region0: #{pixel_encoder_forward.5}
  #allocation0 [shape = 'u32[]', space=smem, size = 0x4, offset = 0x4, fixed_abs, tag = 'smem constant byte address 0x4 - core index']
  #allocation1 [shape = 'u32[72,128]{1,0:T(1,128)}', space=vmem, size = 0x9000, scoped, tag = 'internal scratch']
  %s0 = inlined_call_operand.vmem [shape: bf16[32,144], index: 0, kind: input, shape index: {}]
  %s1 = inlined_call_operand.vmem [shape: bf16[144,128], index: 1, kind: input, shape index: {}]
  %s2 = inlined_call_operand.vmem [shape: f32[1,128], index: 2, kind: input, shape index: {}]
  %s3 = inlined_call_operand.vmem [shape: bf16[32,128], index: 3, kind: output, shape index: {}]
  %s4 = sld [smem:[#allocation0]]
  $region45: #{pixel_encoder_forward.5} parent=0
    _
  %s6 = ssub.s32 1, %s4
  %s7 = scalar_select 0, %s6, %s4
  loop: start=0, step=1, limit=4
  $region2: #{pixel_encoder_forward.5} parent=0 // loop_pre_header
    _
  $region3: #{pixel_encoder_forward.5} parent=0 // loop_header
    %s9 = sphi 0, %s13
    %p10 = scmp.ge.s32.totalorder %s9, 4
    %s16 = sphi 0, %s35
    %s17 = sphi 0, %s31
    %s18 = sphi 0, %s27
    %s19 = sphi 0, %s16
    %s20 = sphi 0, %s17
    %s21 = sphi 0, %s18
    %s22 = sphi 0, %s19
    %s23 = sphi 0, %s20
    %s24 = sphi 0, %s21
    %s40 = sphi 0, %s42
    %s43 = sphi 0, %s40
    %s44 = sphi 0, %s43
    %s60 = sphi 0, %s44
    %s68 = sphi 0, %s70
    %s71 = sphi 0, %s68
    %s72 = sphi 0, %s71
    %s88 = sphi 0, %s72
    %s94 = sphi 0, %s96
    %s97 = sphi 0, %s94
    %s98 = sphi 0, %s97
    %s114 = sphi 0, %s98
    %s122 = sphi 0, %s124
    %s125 = sphi 0, %s122
    %s126 = sphi 0, %s125
    %s142 = sphi 0, %s126
  $region4: #{pixel_encoder_forward.5} parent=0 // loop_header_branch
    %12 = sbr.rel (%p10) target = $region8
  $region5: #{pixel_encoder_forward.5} parent=0 // loop_body
    %s14 = ssub.s32 %s9, 1
    %s15 = ssub.s32 %s9, 2
    %s25 = sadd.s32 1, %s18
    %p26 = scmp.ge.s32.totalorder %s25, 1
    %s27 = scalar_select %p26, 0, %s25
    %s28 = sadd.s32 1, %s17
    %s29 = scalar_select %p26, %s28, %s17
    %p30 = scmp.ge.s32.totalorder %s29, 1
    %s31 = scalar_select %p30, 0, %s29
    %s32 = sadd.s32 1, %s16
    %s33 = scalar_select %p30, %s32, %s16
    %p34 = scmp.ge.s32.totalorder %s33, 2
    %s35 = scalar_select %p34, 0, %s33
    %s36 = ssub.s32 %s16, %s35
    %s37 = ssub.s32 %s18, %s27
    %s38 = sor.u32 %s36, %s37
    %p39 = scmp.eq.s32.totalorder %s38, 0
    %s41 = sadd.s32 %s40, 1
    %s42 = scalar_select %p39, %s40, %s41
    %p45 = pneg %p39
    %p46 = scmp.eq.s32.totalorder %s9, 1
    %p47 = por %p45, %p46
    %p48 = scmp.ne.s32.totalorder %s40, %s43
    %p49 = scmp.eq.s32.totalorder %s9, 0
    %p50 = por %p48, %p49
    %p51 = scmp.ne.s32.totalorder %s40, %s43
    %p52 = scmp.eq.s32.totalorder %s14, 1
    %p53 = por %p51, %p52
    %p54 = scmp.ne.s32.totalorder %s43, %s44
    %p55 = scmp.eq.s32.totalorder %s14, 0
    %p56 = por %p54, %p55
    %p57 = scmp.ne.s32.totalorder %s43, %s44
    %p58 = scmp.eq.s32.totalorder %s15, 1
    %p59 = por %p57, %p58
    %p61 = scmp.ne.s32.totalorder %s44, %s60
    %p62 = scmp.eq.s32.totalorder %s15, 0
    %p63 = por %p61, %p62
    %s64 = ssub.s32 %s18, %s27
    %s65 = ssub.s32 %s17, %s31
    %s66 = sor.u32 %s64, %s65
    %p67 = scmp.eq.s32.totalorder %s66, 0
    %s69 = sadd.s32 %s68, 1
    %s70 = scalar_select %p67, %s68, %s69
    %p73 = pneg %p67
    %p74 = scmp.eq.s32.totalorder %s9, 1
    %p75 = por %p73, %p74
    %p76 = scmp.ne.s32.totalorder %s68, %s71
    %p77 = scmp.eq.s32.totalorder %s9, 0
    %p78 = por %p76, %p77
    %p79 = scmp.ne.s32.totalorder %s68, %s71
    %p80 = scmp.eq.s32.totalorder %s14, 1
    %p81 = por %p79, %p80
    %p82 = scmp.ne.s32.totalorder %s71, %s72
    %p83 = scmp.eq.s32.totalorder %s14, 0
    %p84 = por %p82, %p83
    %p85 = scmp.ne.s32.totalorder %s71, %s72
    %p86 = scmp.eq.s32.totalorder %s15, 1
    %p87 = por %p85, %p86
    %p89 = scmp.ne.s32.totalorder %s72, %s88
    %p90 = scmp.eq.s32.totalorder %s15, 0
    %p91 = por %p89, %p90
    %s92 = ssub.s32 %s17, %s31
    %p93 = scmp.eq.s32.totalorder %s92, 0
    %s95 = sadd.s32 %s94, 1
    %s96 = scalar_select %p93, %s94, %s95
    %p99 = pneg %p93
    %p100 = scmp.eq.s32.totalorder %s9, 1
    %p101 = por %p99, %p100
    %p102 = scmp.ne.s32.totalorder %s94, %s97
    %p103 = scmp.eq.s32.totalorder %s9, 0
    %p104 = por %p102, %p103
    %p105 = scmp.ne.s32.totalorder %s94, %s97
    %p106 = scmp.eq.s32.totalorder %s14, 1
    %p107 = por %p105, %p106
    %p108 = scmp.ne.s32.totalorder %s97, %s98
    %p109 = scmp.eq.s32.totalorder %s14, 0
    %p110 = por %p108, %p109
    %p111 = scmp.ne.s32.totalorder %s97, %s98
    %p112 = scmp.eq.s32.totalorder %s15, 1
    %p113 = por %p111, %p112
    %p115 = scmp.ne.s32.totalorder %s98, %s114
    %p116 = scmp.eq.s32.totalorder %s15, 0
    %p117 = por %p115, %p116
    %s118 = ssub.s32 %s16, %s35
    %s119 = ssub.s32 %s17, %s31
    %s120 = sor.u32 %s118, %s119
    %p121 = scmp.eq.s32.totalorder %s120, 0
    %s123 = sadd.s32 %s122, 1
    %s124 = scalar_select %p121, %s122, %s123
    %p127 = pneg %p121
    %p128 = scmp.eq.s32.totalorder %s9, 1
    %p129 = por %p127, %p128
    %p130 = scmp.ne.s32.totalorder %s122, %s125
    %p131 = scmp.eq.s32.totalorder %s9, 0
    %p132 = por %p130, %p131
    %p133 = scmp.ne.s32.totalorder %s122, %s125
    %p134 = scmp.eq.s32.totalorder %s14, 1
    %p135 = por %p133, %p134
    %p136 = scmp.ne.s32.totalorder %s125, %s126
    %p137 = scmp.eq.s32.totalorder %s14, 0
    %p138 = por %p136, %p137
    %p139 = scmp.ne.s32.totalorder %s125, %s126
    %p140 = scmp.eq.s32.totalorder %s15, 1
    %p141 = por %p139, %p140
    %p143 = scmp.ne.s32.totalorder %s126, %s142
    %p144 = scmp.eq.s32.totalorder %s15, 0
    %p145 = por %p143, %p144
    %p146 = scmp.le.s32.totalorder 1, %s9
    %p147 = scmp.lt.s32.totalorder %s9, 3
    %p148 = pnand %p146, %p147
    %p149 = pneg %p148
    // Predicated region
    $region9: #{pixel_encoder_forward.5} parent=5 // pred_check
      _
    $region10: #{pixel_encoder_forward.5} parent=5 // pred_check_branch
      %151 = sbr.rel (%p148) target = $region12
    $region11: #{pixel_encoder_forward.5} parent=5 // pred_region
      %s152 = ssub.s32 %s9, 1
      // Predicated region
      $region13: #{pixel_encoder_forward.5} parent=11 // pred_check
        %p153 = pneg %p84
      $region14: #{pixel_encoder_forward.5} parent=11 // pred_check_branch
        %155 = sbr.rel (%p153) target = $region16
      $region15: #{pixel_encoder_forward.5} parent=11 // pred_region
        %s156 = smul.u32 18, %s21
        %p157 = scmp.lt.s32.totalorder %s156, 17
        %s158 = scalar_select %p157, %s156, 17
        %p159 = scmp.lt.s32.totalorder %s20, 0
        %s160 = scalar_select %p159, %s20, 0
        %s161 = sadd.s32 %s160, %s158
        %s162 = smul.addr %s161, 4
        %s163 = scalar_lea.vmem %s1, %s162
        %s164 = smul.u32 18, %s21
      $region16: #{pixel_encoder_forward.5} parent=11 // pred_fallthru
        _
      // Predicated region
      $region17: #{pixel_encoder_forward.5} parent=11 // pred_check
        %p165 = pneg %p110
      $region18: #{pixel_encoder_forward.5} parent=11 // pred_check_branch
        %167 = sbr.rel (%p165) target = $region20
      $region19: #{pixel_encoder_forward.5} parent=11 // pred_region
        %p168 = scmp.lt.s32.totalorder %s20, 0
        %s169 = scalar_select %p168, %s20, 0
        %s170 = scalar_lea.vmem %s2, %s169
      $region20: #{pixel_encoder_forward.5} parent=11 // pred_fallthru
        _
    $region12: #{pixel_encoder_forward.5} parent=5 // pred_fallthru
      _
    %p171 = scmp.lt.s32.totalorder %s9, 2
    // Predicated region
    $region21: #{pixel_encoder_forward.5} parent=5 // pred_check
      %p172 = pneg %p171
    $region22: #{pixel_encoder_forward.5} parent=5 // pred_check_branch
      %174 = sbr.rel (%p172) target = $region24
    $region23: #{pixel_encoder_forward.5} parent=5 // pred_region
      // Predicated region
      $region25: #{pixel_encoder_forward.5} parent=23 // pred_check
        %p175 = pneg %p50
      $region26: #{pixel_encoder_forward.5} parent=23 // pred_check_branch
        %177 = sbr.rel (%p175) target = $region28
      $region27: #{pixel_encoder_forward.5} parent=23 // pred_region
        %s178 = smul.u32 2, %s16
        %s179 = smul.u32 2, %s18
        %p180 = scmp.lt.s32.totalorder %s178, 3
        %s181 = scalar_select %p180, %s178, 3
        %p182 = scmp.lt.s32.totalorder %s179, 1
        %s183 = scalar_select %p182, %s179, 1
        %s184 = smul.addr %s181, 2
        %s185 = sadd.s32 %s183, %s184
        %s186 = smul.addr %s185, 4
        %s187 = scalar_lea.vmem %s0, %s186
        %s188 = smul.u32 2, %s16
        %s189 = smul.u32 2, %s18
      $region28: #{pixel_encoder_forward.5} parent=23 // pred_fallthru
        _
    $region24: #{pixel_encoder_forward.5} parent=5 // pred_fallthru
      _
    %p190 = scmp.le.s32.totalorder 1, %s9
    %p191 = scmp.lt.s32.totalorder %s9, 3
    %p192 = pnand %p190, %p191
    %p193 = pneg %p192
    // Predicated region
    $region29: #{pixel_encoder_forward.5} parent=5 // pred_check
      _
    $region30: #{pixel_encoder_forward.5} parent=5 // pred_check_branch
      %195 = sbr.rel (%p192) target = $region32
    $region31: #{pixel_encoder_forward.5} parent=5 // pred_region
      %s196 = ssub.s32 %s9, 1
      %s197 = smul.u32 2, %s19
      %s198 = smul.u32 2, %s21
      %p199 = scmp.lt.s32.totalorder %s197, 3
      %s200 = scalar_select %p199, %s197, 3
      %p201 = scmp.lt.s32.totalorder %s198, 1
      %s202 = scalar_select %p201, %s198, 1
      %s203 = smul.addr %s200, 2
      %s204 = sadd.s32 %s202, %s203
      %s205 = smul.addr %s204, 4
      %s206 = scalar_lea.vmem %s0, %s205
      %p207 = pneg %p56
      %p208 = pneg %p53
      %s209 = smul.u32 18, %s21
      %p210 = scmp.lt.s32.totalorder %s209, 17
      %s211 = scalar_select %p210, %s209, 17
      %p212 = scmp.lt.s32.totalorder %s20, 0
      %s213 = scalar_select %p212, %s20, 0
      %s214 = sadd.s32 %s213, %s211
      %s215 = smul.addr %s214, 4
      %s216 = scalar_lea.vmem %s1, %s215
      %p217 = pneg %p84
      %p218 = pneg %p81
      %p219 = scmp.lt.s32.totalorder %s20, 0
      %s220 = scalar_select %p219, %s20, 0
      %s221 = scalar_lea.vmem %s2, %s220
      %p222 = pneg %p110
      %p223 = pneg %p107
      %p224 = pneg %p138
      %p225 = pneg %p135
      %s226 = smul.u32 2, %s19
      %p227 = scmp.lt.s32.totalorder %s226, 3
      %s228 = scalar_select %p227, %s226, 3
      %p229 = scmp.lt.s32.totalorder %s20, 0
      %s230 = scalar_select %p229, %s20, 0
      %s231 = sadd.s32 %s230, %s228
      %s232 = smul.addr %s231, 4
      %s233 = scalar_lea.vmem %s3, %s232
      %s234 = smul.u32 2, %s19
      %s235 = smul.u32 2, %s21
      %p236 = scmp.lt.s32.totalorder %s234, 3
      %s237 = scalar_select %p236, %s234, 3
      %p238 = scmp.lt.s32.totalorder %s235, 1
      %s239 = scalar_select %p238, %s235, 1
      %s240 = smul.addr %s237, 2
      %s241 = sadd.s32 %s239, %s240
      %s242 = smul.addr %s241, 4
      %s243 = scalar_lea.vmem %s0, %s242
      %s244 = smul.u32 2, %s19
      %s245 = smul.u32 2, %s21
      %s246 = smul.u32 18, %s21
      %p247 = scmp.lt.s32.totalorder %s246, 17
      %s248 = scalar_select %p247, %s246, 17
      %p249 = scmp.lt.s32.totalorder %s20, 0
      %s250 = scalar_select %p249, %s20, 0
      %s251 = sadd.s32 %s250, %s248
      %s252 = smul.addr %s251, 4
      %s253 = scalar_lea.vmem %s1, %s252
      %s254 = smul.u32 18, %s21
      %p255 = scmp.lt.s32.totalorder %s20, 0
      %s256 = scalar_select %p255, %s20, 0
      %s257 = scalar_lea.vmem %s2, %s256
      %s258 = smul.u32 2, %s19
      %p259 = scmp.lt.s32.totalorder %s258, 3
      %s260 = scalar_select %p259, %s258, 3
      %p261 = scmp.lt.s32.totalorder %s20, 0
      %s262 = scalar_select %p261, %s20, 0
      %s263 = sadd.s32 %s262, %s260
      %s264 = smul.addr %s263, 4
      %s265 = scalar_lea.vmem %s3, %s264
      %s266 = smul.u32 2, %s19
      %v268 = vld [vmem:[%s243] sm:$0xff]
      %v269 = vld [vmem:[%s243 + $0x8] sm:$0xff]
      %v270 = vld [vmem:[%s253] sm:$0xf]
      %v271 = vld [vmem:[%s253 + $0x4] sm:$0xf]
      %v272 = vld [vmem:[%s253 + $0x8] sm:$0xf]
      %v273 = vld [vmem:[%s253 + $0xc] sm:$0xf]
      %v274 = vld [vmem:[%s253 + $0x10] sm:$0xf]
      %v275 = vld [vmem:[%s253 + $0x14] sm:$0xf]
      %v276 = vld [vmem:[%s253 + $0x18] sm:$0xf]
      %v277 = vld [vmem:[%s253 + $0x1c] sm:$0xf]
      %v278 = vld [vmem:[%s253 + $0x20] sm:$0xf]
      %v279 = vld [vmem:[%s253 + $0x24] sm:$0xf]
      %v280 = vld [vmem:[%s253 + $0x28] sm:$0xf]
      %v281 = vld [vmem:[%s253 + $0x2c] sm:$0xf]
      %v282 = vld [vmem:[%s253 + $0x30] sm:$0xf]
      %v283 = vld [vmem:[%s253 + $0x34] sm:$0xf]
      %v284 = vld [vmem:[%s253 + $0x38] sm:$0xf]
      %v285 = vld [vmem:[%s253 + $0x3c] sm:$0xf]
      %v286 = vld [vmem:[%s253 + $0x40] sm:$0xf]
      %v287 = vld [vmem:[%s253 + $0x44] sm:$0xf]
      %v288 = vld [vmem:[%s257] sm:$0x1]
      %v290 = vperm.slane %v288, 0
      %v294 = vunpack.c.l.b16 %v268
      %v295 = vunpack.c.h.b16 %v268
      %v296 = vunpack.c.l.b16 %v269
      %v297 = vunpack.c.h.b16 %v269
      %v298 = vpack.c.b16 %v296, %v294
      %v299 = vpack.c.b16 %v297, %v295
      %v319 = vunpack.c.l.b16 %v270
      %v320 = vunpack.c.l.b16 %v271
      %v321 = vunpack.c.l.b16 %v272
      %v322 = vunpack.c.l.b16 %v273
      %v323 = vunpack.c.l.b16 %v274
      %v324 = vunpack.c.l.b16 %v275
      %v325 = vunpack.c.l.b16 %v276
      %v326 = vunpack.c.l.b16 %v277
      %v327 = vunpack.c.l.b16 %v278
      %v328 = vunpack.c.l.b16 %v279
      %v329 = vunpack.c.l.b16 %v280
      %v330 = vunpack.c.l.b16 %v281
      %v331 = vunpack.c.l.b16 %v282
      %v332 = vunpack.c.l.b16 %v283
      %v333 = vunpack.c.l.b16 %v284
      %v334 = vunpack.c.l.b16 %v285
      %v335 = vunpack.c.l.b16 %v286
      %v336 = vunpack.c.l.b16 %v287
      %v337 = vpack.c.b16 %v320, %v319
      %v338 = vpack.c.b16 %v322, %v321
      %v339 = vpack.c.b16 %v324, %v323
      %v340 = vpack.c.b16 %v326, %v325
      %v341 = vpack.c.b16 %v328, %v327
      %v342 = vpack.c.b16 %v330, %v329
      %v343 = vpack.c.b16 %v332, %v331
      %v344 = vpack.c.b16 %v334, %v333
      %v345 = vpack.c.b16 %v336, %v335
      %vm355 = vcmask 130048
      %v357 = vsel %vm355, %v299, 0
      %359 = vmatpush.bf16.msra.mxu0 %v344
      %360 = vmatpush.bf16.msra.mxu0 %v343
      %361 = vmatpush.bf16.msra.mxu0 %v342
      %362 = vmatpush.bf16.msra.mxu0 %v341
      %363 = vmatpush.bf16.msra.mxu0 %v340
      %364 = vmatpush.bf16.msra.mxu0 %v339
      %365 = vmatpush.bf16.msra.mxu0 %v338
      %366 = vmatpush.bf16.msra.mxu0 %v337
      %367 = vmatmul.bf16.gmra.mxu0 %v298
      %v368 = vpop.f32.mrf.mxu0
      %v369 = vadd.f32 %v290, %v368
      %v370 = vpop.f32.mrf.mxu0
      %v371 = vadd.f32 %v290, %v370
      %372 = vdwg.mxu0
      %373 = vmatpush.bf16.msra.mxu0 0
      %374 = vmatpush.bf16.msra.mxu0 0
      %375 = vmatpush.bf16.msra.mxu0 0
      %376 = vmatpush.bf16.msra.mxu0 0
      %377 = vmatpush.bf16.msra.mxu0 0
      %378 = vmatpush.bf16.msra.mxu0 0
      %379 = vmatpush.bf16.msra.mxu0 0
      %380 = vmatpush.bf16.msra.mxu0 %v345
      %381 = vmatmul.bf16.gmra.mxu0 %v357
      %v382 = vpop.f32.mrf.mxu0
      %v383 = vadd.f32 %v369, %v382
      %v384 = vpop.f32.mrf.mxu0
      %v385 = vadd.f32 %v371, %v384
      %386 = vdwg.mxu0
      %v387 = vmax.f32 %v383, 0.0
      %v388 = vmax.f32 %v385, 0.0
      %v389 = vpack.c.bf16 %v387, %v387
      %v390 = vpack.c.bf16 %v388, %v388
      %391 = vst [vmem:[%s265] sm:$0xf] %v389
      %392 = vst [vmem:[%s265 + $0x4] sm:$0xf] %v390
      %s393 = smul.u32 2, %s19
      %p394 = scmp.lt.s32.totalorder %s393, 3
      %s395 = scalar_select %p394, %s393, 3
      %p396 = scmp.lt.s32.totalorder %s20, 0
      %s397 = scalar_select %p396, %s20, 0
      %s398 = sadd.s32 %s397, %s395
      %s399 = smul.addr %s398, 4
      %s400 = scalar_lea.vmem %s3, %s399
      // Predicated region
      $region33: #{pixel_encoder_forward.5} parent=31 // pred_check
        %p401 = pneg %p135
      $region34: #{pixel_encoder_forward.5} parent=31 // pred_check_branch
        %403 = sbr.rel (%p401) target = $region36
      $region35: #{pixel_encoder_forward.5} parent=31 // pred_region
        %s404 = smul.u32 2, %s19
      $region36: #{pixel_encoder_forward.5} parent=31 // pred_fallthru
        _
    $region32: #{pixel_encoder_forward.5} parent=5 // pred_fallthru
      _
    %p405 = scmp.le.s32.totalorder 2, %s9
    // Predicated region
    $region37: #{pixel_encoder_forward.5} parent=5 // pred_check
      %p406 = pneg %p405
    $region38: #{pixel_encoder_forward.5} parent=5 // pred_check_branch
      %408 = sbr.rel (%p406) target = $region40
    $region39: #{pixel_encoder_forward.5} parent=5 // pred_region
      %s409 = ssub.s32 %s9, 2
      // Predicated region
      $region41: #{pixel_encoder_forward.5} parent=39 // pred_check
        %p410 = pneg %p141
      $region42: #{pixel_encoder_forward.5} parent=39 // pred_check_branch
        %412 = sbr.rel (%p410) target = $region44
      $region43: #{pixel_encoder_forward.5} parent=39 // pred_region
        %s413 = smul.u32 2, %s22
        %p414 = scmp.lt.s32.totalorder %s413, 3
        %s415 = scalar_select %p414, %s413, 3
        %p416 = scmp.lt.s32.totalorder %s23, 0
        %s417 = scalar_select %p416, %s23, 0
        %s418 = sadd.s32 %s417, %s415
        %s419 = smul.addr %s418, 4
        %s420 = scalar_lea.vmem %s3, %s419
      $region44: #{pixel_encoder_forward.5} parent=39 // pred_fallthru
        _
    $region40: #{pixel_encoder_forward.5} parent=5 // pred_fallthru
      _
  $region6: #{pixel_encoder_forward.5} parent=0 // loop_footer
    %s13 = sadd.s32 1, %s9
  $region7: #{pixel_encoder_forward.5} parent=0 // loop_footer_branch
    %8 = sbr.rel target = $region3
  $region8: #{pixel_encoder_forward.5} parent=0 // loop_exit
    _

// kernel: pixel_encoder_forward.6
$region0: #{pixel_encoder_forward.6}
  #allocation0 [shape = 'u32[]', space=smem, size = 0x4, offset = 0x4, fixed_abs, tag = 'smem constant byte address 0x4 - core index']
  #allocation1 [shape = 'u32[72,128]{1,0:T(1,128)}', space=vmem, size = 0x9000, scoped, tag = 'internal scratch']
  %s0 = inlined_call_operand.vmem [shape: bf16[16,144], index: 0, kind: input, shape index: {}]
  %s1 = inlined_call_operand.vmem [shape: bf16[144,128], index: 1, kind: input, shape index: {}]
  %s2 = inlined_call_operand.vmem [shape: f32[1,128], index: 2, kind: input, shape index: {}]
  %s3 = inlined_call_operand.vmem [shape: bf16[16,128], index: 3, kind: output, shape index: {}]
  %s4 = sld [smem:[#allocation0]]
  $region22: #{pixel_encoder_forward.6} parent=0
    _
  %s6 = ssub.s32 1, %s4
  %s7 = scalar_select 0, %s6, %s4
  // Predicated region
  $region2: #{pixel_encoder_forward.6} parent=0 // pred_check
    _
  $region3: #{pixel_encoder_forward.6} parent=0 // pred_check_branch
    %9 = sbr.rel (0) target = $region5
  $region4: #{pixel_encoder_forward.6} parent=0 // pred_region
    _
  $region5: #{pixel_encoder_forward.6} parent=0 // pred_fallthru
    _
  // Predicated region
  $region6: #{pixel_encoder_forward.6} parent=0 // pred_check
    _
  $region7: #{pixel_encoder_forward.6} parent=0 // pred_check_branch
    %11 = sbr.rel (0) target = $region9
  $region8: #{pixel_encoder_forward.6} parent=0 // pred_region
    _
  $region9: #{pixel_encoder_forward.6} parent=0 // pred_fallthru
    _
  // Predicated region
  $region10: #{pixel_encoder_forward.6} parent=0 // pred_check
    _
  $region11: #{pixel_encoder_forward.6} parent=0 // pred_check_branch
    %13 = sbr.rel (0) target = $region13
  $region12: #{pixel_encoder_forward.6} parent=0 // pred_region
    _
  $region13: #{pixel_encoder_forward.6} parent=0 // pred_fallthru
    _
  %v15 = vld [vmem:[%s0] sm:$0xff]
  %v16 = vld [vmem:[%s0 + $0x8] sm:$0xff]
  %v17 = vld [vmem:[%s1] sm:$0xf]
  %v18 = vld [vmem:[%s1 + $0x4] sm:$0xf]
  %v19 = vld [vmem:[%s1 + $0x8] sm:$0xf]
  %v20 = vld [vmem:[%s1 + $0xc] sm:$0xf]
  %v21 = vld [vmem:[%s1 + $0x10] sm:$0xf]
  %v22 = vld [vmem:[%s1 + $0x14] sm:$0xf]
  %v23 = vld [vmem:[%s1 + $0x18] sm:$0xf]
  %v24 = vld [vmem:[%s1 + $0x1c] sm:$0xf]
  %v25 = vld [vmem:[%s1 + $0x20] sm:$0xf]
  %v26 = vld [vmem:[%s1 + $0x24] sm:$0xf]
  %v27 = vld [vmem:[%s1 + $0x28] sm:$0xf]
  %v28 = vld [vmem:[%s1 + $0x2c] sm:$0xf]
  %v29 = vld [vmem:[%s1 + $0x30] sm:$0xf]
  %v30 = vld [vmem:[%s1 + $0x34] sm:$0xf]
  %v31 = vld [vmem:[%s1 + $0x38] sm:$0xf]
  %v32 = vld [vmem:[%s1 + $0x3c] sm:$0xf]
  %v33 = vld [vmem:[%s1 + $0x40] sm:$0xf]
  %v34 = vld [vmem:[%s1 + $0x44] sm:$0xf]
  %v35 = vld [vmem:[%s2] sm:$0x1]
  %v37 = vperm.slane %v35, 0
  %v41 = vunpack.c.l.b16 %v15
  %v42 = vunpack.c.h.b16 %v15
  %v43 = vunpack.c.l.b16 %v16
  %v44 = vunpack.c.h.b16 %v16
  %v45 = vpack.c.b16 %v43, %v41
  %v46 = vpack.c.b16 %v44, %v42
  %v66 = vunpack.c.l.b16 %v17
  %v67 = vunpack.c.l.b16 %v18
  %v68 = vunpack.c.l.b16 %v19
  %v69 = vunpack.c.l.b16 %v20
  %v70 = vunpack.c.l.b16 %v21
  %v71 = vunpack.c.l.b16 %v22
  %v72 = vunpack.c.l.b16 %v23
  %v73 = vunpack.c.l.b16 %v24
  %v74 = vunpack.c.l.b16 %v25
  %v75 = vunpack.c.l.b16 %v26
  %v76 = vunpack.c.l.b16 %v27
  %v77 = vunpack.c.l.b16 %v28
  %v78 = vunpack.c.l.b16 %v29
  %v79 = vunpack.c.l.b16 %v30
  %v80 = vunpack.c.l.b16 %v31
  %v81 = vunpack.c.l.b16 %v32
  %v82 = vunpack.c.l.b16 %v33
  %v83 = vunpack.c.l.b16 %v34
  %v84 = vpack.c.b16 %v67, %v66
  %v85 = vpack.c.b16 %v69, %v68
  %v86 = vpack.c.b16 %v71, %v70
  %v87 = vpack.c.b16 %v73, %v72
  %v88 = vpack.c.b16 %v75, %v74
  %v89 = vpack.c.b16 %v77, %v76
  %v90 = vpack.c.b16 %v79, %v78
  %v91 = vpack.c.b16 %v81, %v80
  %v92 = vpack.c.b16 %v83, %v82
  %vm102 = vcmask 130048
  %v104 = vsel %vm102, %v46, 0
  %106 = vmatpush.bf16.msra.mxu0 %v91
  %107 = vmatpush.bf16.msra.mxu0 %v90
  %108 = vmatpush.bf16.msra.mxu0 %v89
  %109 = vmatpush.bf16.msra.mxu0 %v88
  %110 = vmatpush.bf16.msra.mxu0 %v87
  %111 = vmatpush.bf16.msra.mxu0 %v86
  %112 = vmatpush.bf16.msra.mxu0 %v85
  %113 = vmatpush.bf16.msra.mxu0 %v84
  %114 = vmatmul.bf16.gmra.mxu0 %v45
  %v115 = vpop.f32.mrf.mxu0
  %v116 = vadd.f32 %v37, %v115
  %v117 = vpop.f32.mrf.mxu0
  %v118 = vadd.f32 %v37, %v117
  %119 = vdwg.mxu0
  %120 = vmatpush.bf16.msra.mxu0 0
  %121 = vmatpush.bf16.msra.mxu0 0
  %122 = vmatpush.bf16.msra.mxu0 0
  %123 = vmatpush.bf16.msra.mxu0 0
  %124 = vmatpush.bf16.msra.mxu0 0
  %125 = vmatpush.bf16.msra.mxu0 0
  %126 = vmatpush.bf16.msra.mxu0 0
  %127 = vmatpush.bf16.msra.mxu0 %v92
  %128 = vmatmul.bf16.gmra.mxu0 %v104
  %v129 = vpop.f32.mrf.mxu0
  %v130 = vadd.f32 %v116, %v129
  %v131 = vpop.f32.mrf.mxu0
  %v132 = vadd.f32 %v118, %v131
  %133 = vdwg.mxu0
  %v134 = vmax.f32 %v130, 0.0
  %v135 = vmax.f32 %v132, 0.0
  %v136 = vpack.c.bf16 %v134, %v134
  %v137 = vpack.c.bf16 %v135, %v135
  %138 = vst [vmem:[%s3] sm:$0xf] %v136
  %139 = vst [vmem:[%s3 + $0x4] sm:$0xf] %v137
  // Predicated region
  $region14: #{pixel_encoder_forward.6} parent=0 // pred_check
    _
  $region15: #{pixel_encoder_forward.6} parent=0 // pred_check_branch
    %141 = sbr.rel (0) target = $region17
  $region16: #{pixel_encoder_forward.6} parent=0 // pred_region
    _
  $region17: #{pixel_encoder_forward.6} parent=0 // pred_fallthru
    _
  // Predicated region
  $region18: #{pixel_encoder_forward.6} parent=0 // pred_check
    _
  $region19: #{pixel_encoder_forward.6} parent=0 // pred_check_branch
    %143 = sbr.rel (0) target = $region21
  $region20: #{pixel_encoder_forward.6} parent=0 // pred_region
    _
  $region21: #{pixel_encoder_forward.6} parent=0 // pred_fallthru
    _

// kernel: pixel_encoder_forward.7
$region0: #{pixel_encoder_forward.7}
  #allocation0 [shape = 'u32[]', space=smem, size = 0x4, offset = 0x4, fixed_abs, tag = 'smem constant byte address 0x4 - core index']
  #allocation1 [shape = 'u32[72,128]{1,0:T(1,128)}', space=vmem, size = 0x9000, scoped, tag = 'internal scratch']
  %s0 = inlined_call_operand.vmem [shape: bf16[16,16], index: 0, kind: input, shape index: {}]
  %s1 = inlined_call_operand.vmem [shape: bf16[16,128], index: 1, kind: input, shape index: {}]
  %s2 = inlined_call_operand.vmem [shape: f32[1,128], index: 2, kind: input, shape index: {}]
  %s3 = inlined_call_operand.vmem [shape: f32[16,128], index: 3, kind: output, shape index: {}]
  %s4 = sld [smem:[#allocation0]]
  $region22: #{pixel_encoder_forward.7} parent=0
    _
  %s6 = ssub.s32 1, %s4
  %s7 = scalar_select 0, %s6, %s4
  // Predicated region
  $region2: #{pixel_encoder_forward.7} parent=0 // pred_check
    _
  $region3: #{pixel_encoder_forward.7} parent=0 // pred_check_branch
    %9 = sbr.rel (0) target = $region5
  $region4: #{pixel_encoder_forward.7} parent=0 // pred_region
    _
  $region5: #{pixel_encoder_forward.7} parent=0 // pred_fallthru
    _
  // Predicated region
  $region6: #{pixel_encoder_forward.7} parent=0 // pred_check
    _
  $region7: #{pixel_encoder_forward.7} parent=0 // pred_check_branch
    %11 = sbr.rel (0) target = $region9
  $region8: #{pixel_encoder_forward.7} parent=0 // pred_region
    _
  $region9: #{pixel_encoder_forward.7} parent=0 // pred_fallthru
    _
  // Predicated region
  $region10: #{pixel_encoder_forward.7} parent=0 // pred_check
    _
  $region11: #{pixel_encoder_forward.7} parent=0 // pred_check_branch
    %13 = sbr.rel (0) target = $region13
  $region12: #{pixel_encoder_forward.7} parent=0 // pred_region
    _
  $region13: #{pixel_encoder_forward.7} parent=0 // pred_fallthru
    _
  %v15 = vld [vmem:[%s0] sm:$0xf]
  %v16 = vld [vmem:[%s0 + $0x4] sm:$0xf]
  %v17 = vld [vmem:[%s1] sm:$0xf]
  %v18 = vld [vmem:[%s1 + $0x4] sm:$0xf]
  %v19 = vld [vmem:[%s2] sm:$0x1]
  %v21 = vperm.slane %v19, 0
  %v25 = vunpack.c.l.b16 %v15
  %v26 = vunpack.c.l.b16 %v16
  %v27 = vpack.c.b16 %v26, %v25
  %v30 = vunpack.c.l.b16 %v17
  %v31 = vunpack.c.l.b16 %v18
  %v32 = vpack.c.b16 %v31, %v30
  %vm34 = vcmask 130048
  %v36 = vsel %vm34, %v27, 0
  %38 = vmatpush.bf16.msra.mxu0 0
  %39 = vmatpush.bf16.msra.mxu0 0
  %40 = vmatpush.bf16.msra.mxu0 0
  %41 = vmatpush.bf16.msra.mxu0 0
  %42 = vmatpush.bf16.msra.mxu0 0
  %43 = vmatpush.bf16.msra.mxu0 0
  %44 = vmatpush.bf16.msra.mxu0 0
  %45 = vmatpush.bf16.msra.mxu0 %v32
  %46 = vmatmul.bf16.gmra.mxu0 %v36
  %v47 = vpop.f32.mrf.mxu0
  %v48 = vadd.f32 %v21, %v47
  %v49 = vpop.f32.mrf.mxu0
  %v50 = vadd.f32 %v21, %v49
  %51 = vdwg.mxu0
  %v52 = vmax.f32 %v48, 0.0
  %v53 = vmax.f32 %v50, 0.0
  %54 = vst [vmem:[%s3] sm:$0xff] %v52
  %55 = vst [vmem:[%s3 + $0x8] sm:$0xff] %v53
  // Predicated region
  $region14: #{pixel_encoder_forward.7} parent=0 // pred_check
    _
  $region15: #{pixel_encoder_forward.7} parent=0 // pred_check_branch
    %57 = sbr.rel (0) target = $region17
  $region16: #{pixel_encoder_forward.7} parent=0 // pred_region
    _
  $region17: #{pixel_encoder_forward.7} parent=0 // pred_fallthru
    _
  // Predicated region
  $region18: #{pixel_encoder_forward.7} parent=0 // pred_check
    _
  $region19: #{pixel_encoder_forward.7} parent=0 // pred_check_branch
    %59 = sbr.rel (0) target = $region21
  $region20: #{pixel_encoder_forward.7} parent=0 // pred_region
    _
  $region21: #{pixel_encoder_forward.7} parent=0 // pred_fallthru
    _

</llo_original>
